<compile_context>
chip_gen: v5e
topology: v5e:2x2
jax: 0.10.0
libtpu: 0.0.40
codegen_flags: <defaults>
</compile_context>

<pallas_src>
import jax
import jax.numpy as jnp
import numpy as np
from jax.experimental import pallas as pl
from jax.experimental.pallas import tpu as pltpu


def qfun_kernel(xm_ref, adj_ref, w1_ref, wstack_ref, w8_ref, bias_ref,
                q_ref, nodes_ref):
    f32 = jnp.float32
    bf16 = jnp.bfloat16
    Bb, N, _ = xm_ref.shape            # block_b graphs, N nodes, 3 feats + mask
    hid = wstack_ref.shape[-1]
    BN = Bb * N

    def bdot(a, b):                    # bf16 MXU matmul, f32 accumulation
        return jnp.dot(a.astype(bf16), b.astype(bf16),
                       preferred_element_type=f32)

    xm = xm_ref[...].reshape(BN, 4)    # flat per-node rows (graphs stacked)
    adj = adj_ref[...]                 # [BN, BN] block-diag normalized adjacency
    biases = bias_ref[...]             # [7, hid] f32
    b1, bg1, bg2, b2, b6, b5 = (biases[i:i + 1] for i in range(6))
    b8 = biases[6:7, 0:1]              # [1, 1] scalar bias of lin8

    # lin1: [BN,4] @ [4,hid]; 4th weight row is zero so the mask column is ignored.
    x1 = bdot(xm, w1_ref[...]) + b1

    # Two GCNConv layers (+relu); adjacency is block-diagonal over the batch.
    x2 = jnp.maximum(bdot(adj, bdot(x1, wstack_ref[0])) + bg1, 0.0)
    x3 = jnp.maximum(bdot(adj, bdot(x2, wstack_ref[1])) + bg2, 0.0)

    # lin2(cat([x1,x2,x3], -1)) with the weight pre-split into 3 [hid,hid] chunks.
    nodes = (bdot(x1, wstack_ref[2]) + bdot(x2, wstack_ref[3])
             + bdot(x3, wstack_ref[4]) + b2)                     # [BN, hid]
    nodes_ref[...] = nodes.reshape(Bb, N, hid)

    # scatter_add(nodes, action_sel, -2)[0]: VPU mask-multiply + sublane reduce.
    mask = xm[:, 3:4]                                            # [BN, 1]
    pool = jnp.sum((mask * nodes).reshape(Bb, N, hid), axis=1)   # [Bb, hid]

    # lin6 and the pooled half of lin5 on the Bb pooled rows only (broadcast
    # rows are identical); broadcast happens in the final add.
    g6 = bdot(pool, wstack_ref[5]) + b6                          # [Bb, hid]
    row5 = bdot(jnp.maximum(g6, 0.0), wstack_ref[6])             # [Bb, hid]

    node5 = bdot(jnp.maximum(nodes, 0.0), wstack_ref[7])         # [BN, hid]
    h5 = jnp.maximum(node5.reshape(Bb, N, hid) + row5[:, None, :] + b5, 0.0)

    # lin8 (output width 1): VPU multiply + lane reduction; lane-dense [Bb, N] store.
    w8row = w8_ref[...].astype(f32)                              # [1, hid]
    q_ref[...] = jnp.sum(h5 * w8row, axis=-1) + b8               # [Bb, N]


def q_fun_forward(x, adj_norm, pool_mask, params, block_b=None):
    """x: [B,N,3] f32, adj_norm: [N,N] (shared across batch), pool_mask: [B,N]
    (1.0 where action_sel == 0).  Returns (q [B,N], nodes_vec [B,N,hid]),
    matching Q_Fun.forward(mu=None, ...)."""
    B, N, fin = x.shape
    assert fin == 3
    # Adjacency and pooling semantics are shared/fixed across the batch.
    assert adj_norm.shape == (N, N)
    assert pool_mask.shape == (B, N)

    if block_b is None:
        # 2-way grid keeps both TensorCores busy on v7x; the extra ~0.35us step
        # is negligible on single-TC v5e/v6e (pass block_b=B to collapse it).
        block_b = B // 2 if (B % 2 == 0 and B >= 2) else B
    assert B % block_b == 0
    num_blocks = B // block_b

    wstack = params["wstack"]          # [8, hid, hid] bf16
    hid = wstack.shape[-1]
    bf16 = jnp.bfloat16

    # Fold the pool mask into x as a 4th feature column (one fewer tiny DMA).
    xm = jnp.concatenate([x, pool_mask.astype(x.dtype)[..., None]], axis=-1)

    # Block-diagonal normalized adjacency for block_b graphs per step.
    # TODO(synk): if N (or block_b*N) grows large, tile this along rows with an
    # extra grid axis and set vmem_limit_bytes explicitly (v7x has 64 MiB VMEM).
    adj_bd = jnp.kron(jnp.eye(block_b, dtype=jnp.float32), adj_norm).astype(bf16)

    BN = block_b * N
    flops_per_step = (
        2 * BN * 4 * hid                               # lin1
        + 2 * (2 * BN * hid * hid + 2 * BN * BN * hid)  # two GCN layers
        + 2 * 3 * BN * hid * hid                       # lin2 (pre-split concat)
        + BN * hid                                     # pooling (VPU)
        + 2 * 2 * block_b * hid * hid                  # lin6 + pooled lin5
        + 2 * BN * hid * hid                           # lin5 (node part)
        + 2 * BN * hid)                                # lin8 reduction
    bytes_accessed = (4 * xm.size + 2 * adj_bd.size
                      + 2 * (params["w1"].size + wstack.size + params["w8"].size)
                      + 4 * params["bias"].size
                      + 4 * (B * N + B * N * hid))

    grid_spec = pltpu.PrefetchScalarGridSpec(
        num_scalar_prefetch=0,
        grid=(num_blocks,),
        in_specs=[
            pl.BlockSpec((block_b, N, 4), lambda b: (b, 0, 0)),   # x + mask
            pl.BlockSpec((BN, BN), lambda b: (0, 0)),             # block-diag adj
            pl.BlockSpec((4, hid), lambda b: (0, 0)),             # lin1 weight (padded)
            pl.BlockSpec((8, hid, hid), lambda b: (0, 0, 0)),     # packed weights
            pl.BlockSpec((1, hid), lambda b: (0, 0)),             # lin8 row
            pl.BlockSpec((7, hid), lambda b: (0, 0)),             # packed biases (f32)
        ],
        out_specs=(
            pl.BlockSpec((None, block_b, N), lambda b: (b, 0, 0)),    # q (lane-dense)
            pl.BlockSpec((block_b, N, hid), lambda b: (b, 0, 0)),     # nodes_vec
        ),
    )

    q, nodes_vec = pl.pallas_call(
        qfun_kernel,
        out_shape=(jax.ShapeDtypeStruct((num_blocks, block_b, N), jnp.float32),
                   jax.ShapeDtypeStruct((B, N, hid), jnp.float32)),
        grid_spec=grid_spec,
        compiler_params=pltpu.CompilerParams(
            dimension_semantics=("parallel",)),
        cost_estimate=pl.CostEstimate(flops=int(num_blocks * flops_per_step),
                                      transcendentals=0,
                                      bytes_accessed=int(bytes_accessed)),
    )(xm, adj_bd, params["w1"], wstack, params["w8"], params["bias"])
    return q.reshape(B, N), nodes_vec


def gcn_normalized_adjacency(a):
    """GCNConv normalization: D^-1/2 (A + I) D^-1/2 with unit edge weights."""
    a_hat = a + np.eye(a.shape[0], dtype=np.float32)
    deg = a_hat.sum(axis=1)
    d_inv_sqrt = 1.0 / np.sqrt(np.maximum(deg, 1e-12))
    return (a_hat * d_inv_sqrt[:, None]) * d_inv_sqrt[None, :]


def _deq(w):
    """Round-trip through bf16 so kernel (bf16) and reference (f32) share values."""
    return jnp.asarray(w, jnp.float32).astype(jnp.bfloat16).astype(jnp.float32)


def init_params(key, hid):
    """PyTorch-style [out,in] weights; packed / pre-transposed / bf16 for the kernel.
    `raw` holds the bf16-rounded f32 weights used by the pure-JAX reference."""
    def lin(k, out_dim, in_dim, scale=0.1):
        kw, kb = jax.random.split(k)
        w = scale * jax.random.normal(kw, (out_dim, in_dim), jnp.float32)
        b = scale * jax.random.normal(kb, (out_dim,), jnp.float32)
        return w, b

    keys = jax.random.split(key, 7)
    w1, b1 = lin(keys[0], hid, 3)           # lin1: 3 -> hid
    wg1, bg1 = lin(keys[1], hid, hid)       # GCNConv 1
    wg2, bg2 = lin(keys[2], hid, hid)       # GCNConv 2
    w2, b2 = lin(keys[3], hid, 3 * hid)     # lin2: 3*hid -> hid
    w6, b6 = lin(keys[4], hid, hid)         # lin6
    w5, b5 = lin(keys[5], hid, 2 * hid)     # lin5: 2*hid -> hid
    w8, b8 = lin(keys[6], 1, hid)           # lin8: hid -> 1
    # NOTE: lin3, lin4, lin7 exist in __init__ but are unused in forward().

    bf16 = jnp.bfloat16
    w1_pad = jnp.zeros((4, hid), jnp.float32).at[:3].set(w1.T)   # mask col -> zero row
    w2t, w5t = w2.T, w5.T
    wstack = jnp.stack([wg1.T, wg2.T,
                        w2t[:hid], w2t[hid:2 * hid], w2t[2 * hid:],
                        w6.T, w5t[:hid], w5t[hid:]], axis=0)     # [8, hid, hid]
    bias = jnp.zeros((7, hid), jnp.float32)
    bias = bias.at[0].set(b1).at[1].set(bg1).at[2].set(bg2)
    bias = bias.at[3].set(b2).at[4].set(b6).at[5].set(b5)
    bias = bias.at[6, 0].set(b8[0])

    params = {"w1": w1_pad.astype(bf16), "wstack": wstack.astype(bf16),
              "w8": w8.astype(bf16), "bias": bias}
    raw = dict(w1=_deq(w1), b1=b1, wg1=_deq(wg1), bg1=bg1, wg2=_deq(wg2), bg2=bg2,
               w2=_deq(w2), b2=b2, w6=_deq(w6), b6=b6, w5=_deq(w5), b5=b5,
               w8=_deq(w8), b8=b8)
    return params, raw


def q_fun_reference(x, adj_norm, pool_mask, raw):
    """Plain-JAX mirror of Q_Fun.forward(mu=None, ...) for correctness checking."""
    def single(xb, maskb):
        x1 = xb @ raw["w1"].T + raw["b1"]
        x2 = jax.nn.relu(adj_norm @ (x1 @ raw["wg1"].T) + raw["bg1"])
        x3 = jax.nn.relu(adj_norm @ (x2 @ raw["wg2"].T) + raw["bg2"])
        nodes = jnp.concatenate([x1, x2, x3], axis=-1) @ raw["w2"].T + raw["b2"]
        pool = (maskb[:, None] * nodes).sum(axis=0, keepdims=True)   # [1, hid]
        gp2 = jnp.broadcast_to(pool, nodes.shape)
        cat = jnp.concatenate([gp2 @ raw["w6"].T + raw["b6"], nodes], axis=-1)
        h5 = jax.nn.relu(jax.nn.relu(cat) @ raw["w5"].T + raw["b5"])
        q = (h5 @ raw["w8"].T + raw["b8"])[:, 0]
        return q, nodes
    return jax.vmap(single)(x, pool_mask)


if __name__ == "__main__":
    key = jax.random.PRNGKey(0)
    k_param, k_x, k_sel = jax.random.split(key, 3)

    B = 4              # batch of independent graph evaluations
    N = 8              # n_actions = net_old.shape[0]
    hid = 32
    in_dim = 3         # lin1 takes 3 input features

    # Deterministic adjacency (ring graph), binary as produced by change().
    net_old = np.zeros((N, N), dtype=np.float32)
    for i in range(N):
        net_old[i, (i + 1) % N] = 1.0
        net_old[(i + 1) % N, i] = 1.0
    # Round adjacency / inputs through bf16 so the only kernel-vs-reference
    # difference is in-kernel activation rounding / accumulation order.
    adj_norm = _deq(gcn_normalized_adjacency(net_old))

    x = _deq(jax.random.normal(k_x, (B, N, in_dim), jnp.float32))

    # action_sel: 0/1 per node; pooling sums rows where action_sel == 0.
    action_sel = jax.random.bernoulli(k_sel, 0.5, (B, N)).astype(jnp.int32)
    pool_mask = (action_sel == 0).astype(jnp.float32)            # [B, N]

    params, raw = init_params(k_param, hid)

    q_values, nodes_vec = q_fun_forward(x, adj_norm, pool_mask, params)
    jax.block_until_ready((q_values, nodes_vec))

    assert q_values.shape == (B, N)
    assert nodes_vec.shape == (B, N, hid)

    q_ref, nodes_ref = q_fun_reference(x, adj_norm, pool_mask, raw)
    np.testing.assert_allclose(np.asarray(q_values), np.asarray(q_ref),
                               rtol=1e-2, atol=1e-2)
    np.testing.assert_allclose(np.asarray(nodes_vec), np.asarray(nodes_ref),
                               rtol=1e-2, atol=1e-2)

    # TODO(synk): `number` and the Dropout modules in the PyTorch forward are
    # dead code (never applied to the returned tensors), so they are omitted.
    print("KERNEL_OK")
</pallas_src>

<mosaic_0001>
module attributes {stable_mosaic.version = 11 : i64} {
  func.func @qfun_kernel(%arg0: i32, %arg1: memref<2x8x4xf32, #tpu.memory_space<vmem>>, %arg2: memref<16x16xbf16, #tpu.memory_space<vmem>>, %arg3: memref<4x32xbf16, #tpu.memory_space<vmem>>, %arg4: memref<8x32x32xbf16, #tpu.memory_space<vmem>>, %arg5: memref<1x32xbf16, #tpu.memory_space<vmem>>, %arg6: memref<7x32xf32, #tpu.memory_space<vmem>>, %arg7: memref<1x2x8xf32, #tpu.memory_space<vmem>>, %arg8: memref<2x8x32xf32, #tpu.memory_space<vmem>>) attributes {dimension_semantics = [#tpu.dimension_semantics<parallel>], iteration_bounds = array<i64: 2>, scalar_prefetch = 0 : i64, scratch_operands = 0 : i64, tpu.core_type = #tpu.core_type<tc>, window_params = [{transform_indices = @transform_0, window_bounds = array<i64: 2, 8, 4>}, {pipeline_mode = #tpu.pipeline_mode<synchronous>, transform_indices = @transform_1, window_bounds = array<i64: 16, 16>}, {pipeline_mode = #tpu.pipeline_mode<synchronous>, transform_indices = @transform_2, window_bounds = array<i64: 4, 32>}, {pipeline_mode = #tpu.pipeline_mode<synchronous>, transform_indices = @transform_3, window_bounds = array<i64: 8, 32, 32>}, {pipeline_mode = #tpu.pipeline_mode<synchronous>, transform_indices = @transform_4, window_bounds = array<i64: 1, 32>}, {pipeline_mode = #tpu.pipeline_mode<synchronous>, transform_indices = @transform_5, window_bounds = array<i64: 7, 32>}, {transform_indices = @transform_6, window_bounds = array<i64: 1, 2, 8>}, {transform_indices = @transform_7, window_bounds = array<i64: 2, 8, 32>}]} {
    %c0 = arith.constant 0 : index
    %c0_0 = arith.constant 0 : index
    %c0_1 = arith.constant 0 : index
    %0 = vector.load %arg1[%c0, %c0_0, %c0_1] : memref<2x8x4xf32, #tpu.memory_space<vmem>>, vector<2x8x4xf32>
    %1 = vector.shape_cast %0 : vector<2x8x4xf32> to vector<16x4xf32>
    %c0_2 = arith.constant 0 : index
    %c0_3 = arith.constant 0 : index
    %2 = vector.load %arg2[%c0_2, %c0_3] : memref<16x16xbf16, #tpu.memory_space<vmem>>, vector<16x16xbf16>
    %c0_4 = arith.constant 0 : index
    %c0_5 = arith.constant 0 : index
    %3 = vector.load %arg6[%c0_4, %c0_5] : memref<7x32xf32, #tpu.memory_space<vmem>>, vector<7x32xf32>
    %4 = vector.extract_strided_slice %3 {offsets = [0, 0], sizes = [1, 32], strides = [1, 1]} : vector<7x32xf32> to vector<1x32xf32>
    %5 = vector.extract_strided_slice %3 {offsets = [1, 0], sizes = [1, 32], strides = [1, 1]} : vector<7x32xf32> to vector<1x32xf32>
    %6 = vector.extract_strided_slice %3 {offsets = [2, 0], sizes = [1, 32], strides = [1, 1]} : vector<7x32xf32> to vector<1x32xf32>
    %7 = vector.extract_strided_slice %3 {offsets = [3, 0], sizes = [1, 32], strides = [1, 1]} : vector<7x32xf32> to vector<1x32xf32>
    %8 = vector.extract_strided_slice %3 {offsets = [4, 0], sizes = [1, 32], strides = [1, 1]} : vector<7x32xf32> to vector<1x32xf32>
    %9 = vector.extract_strided_slice %3 {offsets = [5, 0], sizes = [1, 32], strides = [1, 1]} : vector<7x32xf32> to vector<1x32xf32>
    %10 = vector.extract_strided_slice %3 {offsets = [6, 0], sizes = [1, 1], strides = [1, 1]} : vector<7x32xf32> to vector<1x1xf32>
    %c0_6 = arith.constant 0 : index
    %c0_7 = arith.constant 0 : index
    %11 = vector.load %arg3[%c0_6, %c0_7] : memref<4x32xbf16, #tpu.memory_space<vmem>>, vector<4x32xbf16>
    %12 = arith.truncf %1 : vector<16x4xf32> to vector<16x4xbf16>
    %cst = arith.constant dense<0.000000e+00> : vector<16x32xf32>
    %13 = tpu.matmul %12, %11, %cst {dimension_numbers = #tpu.dot_dimension_numbers<[1], [0], [0], [1], [0, 0, 1, 1], [], []>} : vector<16x4xbf16>, vector<4x32xbf16>, vector<16x32xf32> -> vector<16x32xf32>
    %14 = vector.broadcast %4 : vector<1x32xf32> to vector<16x32xf32>
    %15 = arith.addf %13, %14 : vector<16x32xf32>
    %c0_8 = arith.constant 0 : index
    %c0_9 = arith.constant 0 : index
    %c0_10 = arith.constant 0 : index
    %16 = vector.load %arg4[%c0_8, %c0_9, %c0_10] : memref<8x32x32xbf16, #tpu.memory_space<vmem>>, vector<1x32x32xbf16>
    %17 = vector.shape_cast %16 : vector<1x32x32xbf16> to vector<32x32xbf16>
    %18 = arith.truncf %15 : vector<16x32xf32> to vector<16x32xbf16>
    %cst_11 = arith.constant dense<0.000000e+00> : vector<16x32xf32>
    %19 = tpu.matmul %18, %17, %cst_11 {dimension_numbers = #tpu.dot_dimension_numbers<[1], [0], [0], [1], [0, 0, 1, 1], [], []>} : vector<16x32xbf16>, vector<32x32xbf16>, vector<16x32xf32> -> vector<16x32xf32>
    %20 = arith.truncf %19 : vector<16x32xf32> to vector<16x32xbf16>
    %cst_12 = arith.constant dense<0.000000e+00> : vector<16x32xf32>
    %21 = tpu.matmul %2, %20, %cst_12 {dimension_numbers = #tpu.dot_dimension_numbers<[1], [0], [0], [1], [0, 0, 1, 1], [], []>} : vector<16x16xbf16>, vector<16x32xbf16>, vector<16x32xf32> -> vector<16x32xf32>
    %22 = vector.broadcast %5 : vector<1x32xf32> to vector<16x32xf32>
    %23 = arith.addf %21, %22 : vector<16x32xf32>
    %cst_13 = arith.constant 0.000000e+00 : f32
    %24 = vector.broadcast %cst_13 : f32 to vector<16x32xf32>
    %25 = arith.maximumf %23, %24 : vector<16x32xf32>
    %c1 = arith.constant 1 : index
    %c0_14 = arith.constant 0 : index
    %c0_15 = arith.constant 0 : index
    %26 = vector.load %arg4[%c1, %c0_14, %c0_15] : memref<8x32x32xbf16, #tpu.memory_space<vmem>>, vector<1x32x32xbf16>
    %27 = vector.shape_cast %26 : vector<1x32x32xbf16> to vector<32x32xbf16>
    %28 = arith.truncf %25 : vector<16x32xf32> to vector<16x32xbf16>
    %cst_16 = arith.constant dense<0.000000e+00> : vector<16x32xf32>
    %29 = tpu.matmul %28, %27, %cst_16 {dimension_numbers = #tpu.dot_dimension_numbers<[1], [0], [0], [1], [0, 0, 1, 1], [], []>} : vector<16x32xbf16>, vector<32x32xbf16>, vector<16x32xf32> -> vector<16x32xf32>
    %30 = arith.truncf %29 : vector<16x32xf32> to vector<16x32xbf16>
    %cst_17 = arith.constant dense<0.000000e+00> : vector<16x32xf32>
    %31 = tpu.matmul %2, %30, %cst_17 {dimension_numbers = #tpu.dot_dimension_numbers<[1], [0], [0], [1], [0, 0, 1, 1], [], []>} : vector<16x16xbf16>, vector<16x32xbf16>, vector<16x32xf32> -> vector<16x32xf32>
    %32 = vector.broadcast %6 : vector<1x32xf32> to vector<16x32xf32>
    %33 = arith.addf %31, %32 : vector<16x32xf32>
    %cst_18 = arith.constant 0.000000e+00 : f32
    %34 = vector.broadcast %cst_18 : f32 to vector<16x32xf32>
    %35 = arith.maximumf %33, %34 : vector<16x32xf32>
    %c2 = arith.constant 2 : index
    %c0_19 = arith.constant 0 : index
    %c0_20 = arith.constant 0 : index
    %36 = vector.load %arg4[%c2, %c0_19, %c0_20] : memref<8x32x32xbf16, #tpu.memory_space<vmem>>, vector<1x32x32xbf16>
    %37 = vector.shape_cast %36 : vector<1x32x32xbf16> to vector<32x32xbf16>
    %38 = arith.truncf %15 : vector<16x32xf32> to vector<16x32xbf16>
    %cst_21 = arith.constant dense<0.000000e+00> : vector<16x32xf32>
    %39 = tpu.matmul %38, %37, %cst_21 {dimension_numbers = #tpu.dot_dimension_numbers<[1], [0], [0], [1], [0, 0, 1, 1], [], []>} : vector<16x32xbf16>, vector<32x32xbf16>, vector<16x32xf32> -> vector<16x32xf32>
    %c3 = arith.constant 3 : index
    %c0_22 = arith.constant 0 : index
    %c0_23 = arith.constant 0 : index
    %40 = vector.load %arg4[%c3, %c0_22, %c0_23] : memref<8x32x32xbf16, #tpu.memory_space<vmem>>, vector<1x32x32xbf16>
    %41 = vector.shape_cast %40 : vector<1x32x32xbf16> to vector<32x32xbf16>
    %42 = arith.truncf %25 : vector<16x32xf32> to vector<16x32xbf16>
    %cst_24 = arith.constant dense<0.000000e+00> : vector<16x32xf32>
    %43 = tpu.matmul %42, %41, %cst_24 {dimension_numbers = #tpu.dot_dimension_numbers<[1], [0], [0], [1], [0, 0, 1, 1], [], []>} : vector<16x32xbf16>, vector<32x32xbf16>, vector<16x32xf32> -> vector<16x32xf32>
    %44 = arith.addf %39, %43 : vector<16x32xf32>
    %c4 = arith.constant 4 : index
    %c0_25 = arith.constant 0 : index
    %c0_26 = arith.constant 0 : index
    %45 = vector.load %arg4[%c4, %c0_25, %c0_26] : memref<8x32x32xbf16, #tpu.memory_space<vmem>>, vector<1x32x32xbf16>
    %46 = vector.shape_cast %45 : vector<1x32x32xbf16> to vector<32x32xbf16>
    %47 = arith.truncf %35 : vector<16x32xf32> to vector<16x32xbf16>
    %cst_27 = arith.constant dense<0.000000e+00> : vector<16x32xf32>
    %48 = tpu.matmul %47, %46, %cst_27 {dimension_numbers = #tpu.dot_dimension_numbers<[1], [0], [0], [1], [0, 0, 1, 1], [], []>} : vector<16x32xbf16>, vector<32x32xbf16>, vector<16x32xf32> -> vector<16x32xf32>
    %49 = arith.addf %44, %48 : vector<16x32xf32>
    %50 = vector.broadcast %7 : vector<1x32xf32> to vector<16x32xf32>
    %51 = arith.addf %49, %50 : vector<16x32xf32>
    %52 = vector.shape_cast %51 : vector<16x32xf32> to vector<2x8x32xf32>
    %c0_28 = arith.constant 0 : index
    %c0_29 = arith.constant 0 : index
    %c0_30 = arith.constant 0 : index
    %53 = vector.load %arg8[%c0_28, %c0_29, %c0_30] : memref<2x8x32xf32, #tpu.memory_space<vmem>>, vector<2x8x32xf32>
    tpu.vector_store %arg8[%c0_28, %c0_29, %c0_30], %52 {strides = array<i32>} : memref<2x8x32xf32, #tpu.memory_space<vmem>>, vector<2x8x32xf32>,
    %54 = vector.extract_strided_slice %1 {offsets = [0, 3], sizes = [16, 1], strides = [1, 1]} : vector<16x4xf32> to vector<16x1xf32>
    %55 = vector.broadcast %54 : vector<16x1xf32> to vector<16x32xf32>
    %56 = arith.mulf %55, %51 : vector<16x32xf32>
    %57 = vector.shape_cast %56 : vector<16x32xf32> to vector<2x8x32xf32>
    %cst_31 = arith.constant dense<0.000000e+00> : vector<2x32xf32>
    %58 = vector.multi_reduction <add>, %57, %cst_31 [1] : vector<2x8x32xf32> to vector<2x32xf32>
    %c5 = arith.constant 5 : index
    %c0_32 = arith.constant 0 : index
    %c0_33 = arith.constant 0 : index
    %59 = vector.load %arg4[%c5, %c0_32, %c0_33] : memref<8x32x32xbf16, #tpu.memory_space<vmem>>, vector<1x32x32xbf16>
    %60 = vector.shape_cast %59 : vector<1x32x32xbf16> to vector<32x32xbf16>
    %61 = arith.truncf %58 : vector<2x32xf32> to vector<2x32xbf16>
    %cst_34 = arith.constant dense<0.000000e+00> : vector<2x32xf32>
    %62 = tpu.matmul %61, %60, %cst_34 {dimension_numbers = #tpu.dot_dimension_numbers<[1], [0], [0], [1], [0, 0, 1, 1], [], []>} : vector<2x32xbf16>, vector<32x32xbf16>, vector<2x32xf32> -> vector<2x32xf32>
    %63 = vector.broadcast %8 : vector<1x32xf32> to vector<2x32xf32>
    %64 = arith.addf %62, %63 : vector<2x32xf32>
    %cst_35 = arith.constant 0.000000e+00 : f32
    %65 = vector.broadcast %cst_35 : f32 to vector<2x32xf32>
    %66 = arith.maximumf %64, %65 : vector<2x32xf32>
    %c6 = arith.constant 6 : index
    %c0_36 = arith.constant 0 : index
    %c0_37 = arith.constant 0 : index
    %67 = vector.load %arg4[%c6, %c0_36, %c0_37] : memref<8x32x32xbf16, #tpu.memory_space<vmem>>, vector<1x32x32xbf16>
    %68 = vector.shape_cast %67 : vector<1x32x32xbf16> to vector<32x32xbf16>
    %69 = arith.truncf %66 : vector<2x32xf32> to vector<2x32xbf16>
    %cst_38 = arith.constant dense<0.000000e+00> : vector<2x32xf32>
    %70 = tpu.matmul %69, %68, %cst_38 {dimension_numbers = #tpu.dot_dimension_numbers<[1], [0], [0], [1], [0, 0, 1, 1], [], []>} : vector<2x32xbf16>, vector<32x32xbf16>, vector<2x32xf32> -> vector<2x32xf32>
    %cst_39 = arith.constant 0.000000e+00 : f32
    %71 = vector.broadcast %cst_39 : f32 to vector<16x32xf32>
    %72 = arith.maximumf %51, %71 : vector<16x32xf32>
    %c7 = arith.constant 7 : index
    %c0_40 = arith.constant 0 : index
    %c0_41 = arith.constant 0 : index
    %73 = vector.load %arg4[%c7, %c0_40, %c0_41] : memref<8x32x32xbf16, #tpu.memory_space<vmem>>, vector<1x32x32xbf16>
    %74 = vector.shape_cast %73 : vector<1x32x32xbf16> to vector<32x32xbf16>
    %75 = arith.truncf %72 : vector<16x32xf32> to vector<16x32xbf16>
    %cst_42 = arith.constant dense<0.000000e+00> : vector<16x32xf32>
    %76 = tpu.matmul %75, %74, %cst_42 {dimension_numbers = #tpu.dot_dimension_numbers<[1], [0], [0], [1], [0, 0, 1, 1], [], []>} : vector<16x32xbf16>, vector<32x32xbf16>, vector<16x32xf32> -> vector<16x32xf32>
    %77 = vector.shape_cast %76 : vector<16x32xf32> to vector<2x8x32xf32>
    %78 = vector.shape_cast %70 : vector<2x32xf32> to vector<2x1x32xf32>
    %79 = vector.broadcast %78 : vector<2x1x32xf32> to vector<2x8x32xf32>
    %80 = arith.addf %77, %79 : vector<2x8x32xf32>
    %81 = vector.shape_cast %9 : vector<1x32xf32> to vector<1x1x32xf32>
    %82 = vector.broadcast %81 : vector<1x1x32xf32> to vector<2x8x32xf32>
    %83 = arith.addf %80, %82 : vector<2x8x32xf32>
    %cst_43 = arith.constant 0.000000e+00 : f32
    %84 = vector.broadcast %cst_43 : f32 to vector<2x8x32xf32>
    %85 = arith.maximumf %83, %84 : vector<2x8x32xf32>
    %c0_44 = arith.constant 0 : index
    %c0_45 = arith.constant 0 : index
    %86 = vector.load %arg5[%c0_44, %c0_45] : memref<1x32xbf16, #tpu.memory_space<vmem>>, vector<1x32xbf16>
    %87 = arith.extf %86 : vector<1x32xbf16> to vector<1x32xf32>
    %88 = vector.shape_cast %87 : vector<1x32xf32> to vector<1x1x32xf32>
    %89 = vector.broadcast %88 : vector<1x1x32xf32> to vector<2x8x32xf32>
    %90 = arith.mulf %85, %89 : vector<2x8x32xf32>
    %cst_46 = arith.constant dense<0.000000e+00> : vector<2x8xf32>
    %91 = vector.multi_reduction <add>, %90, %cst_46 [2] : vector<2x8x32xf32> to vector<2x8xf32>
    %92 = vector.broadcast %10 : vector<1x1xf32> to vector<2x8xf32>
    %93 = arith.addf %91, %92 : vector<2x8xf32>
    %c0_47 = arith.constant 0 : index
    %c0_48 = arith.constant 0 : index
    %c0_49 = arith.constant 0 : index
    %94 = vector.load %arg7[%c0_47, %c0_48, %c0_49] : memref<1x2x8xf32, #tpu.memory_space<vmem>>, vector<1x2x8xf32>
    %95 = vector.shape_cast %94 : vector<1x2x8xf32> to vector<2x8xf32>
    %96 = vector.shape_cast %93 : vector<2x8xf32> to vector<1x2x8xf32>
    tpu.vector_store %arg7[%c0_47, %c0_48, %c0_49], %96 {strides = array<i32>} : memref<1x2x8xf32, #tpu.memory_space<vmem>>, vector<1x2x8xf32>,
    return
  }
  func.func @transform_0(%arg0: i32) -> (i32, i32, i32) {
    %c0_i32 = arith.constant 0 : i32
    %c0_i32_0 = arith.constant 0 : i32
    %c0_i32_1 = arith.constant 0 : i32
    return %arg0, %c0_i32, %c0_i32_0 : i32, i32, i32
  }
  func.func @transform_1(%arg0: i32) -> (i32, i32) {
    %c0_i32 = arith.constant 0 : i32
    %c0_i32_0 = arith.constant 0 : i32
    %c0_i32_1 = arith.constant 0 : i32
    return %c0_i32, %c0_i32_0 : i32, i32
  }
  func.func @transform_2(%arg0: i32) -> (i32, i32) {
    %c0_i32 = arith.constant 0 : i32
    %c0_i32_0 = arith.constant 0 : i32
    %c0_i32_1 = arith.constant 0 : i32
    return %c0_i32, %c0_i32_0 : i32, i32
  }
  func.func @transform_3(%arg0: i32) -> (i32, i32, i32) {
    %c0_i32 = arith.constant 0 : i32
    %c0_i32_0 = arith.constant 0 : i32
    %c0_i32_1 = arith.constant 0 : i32
    %c0_i32_2 = arith.constant 0 : i32
    return %c0_i32, %c0_i32_0, %c0_i32_1 : i32, i32, i32
  }
  func.func @transform_4(%arg0: i32) -> (i32, i32) {
    %c0_i32 = arith.constant 0 : i32
    %c0_i32_0 = arith.constant 0 : i32
    %c0_i32_1 = arith.constant 0 : i32
    return %c0_i32, %c0_i32_0 : i32, i32
  }
  func.func @transform_5(%arg0: i32) -> (i32, i32) {
    %c0_i32 = arith.constant 0 : i32
    %c0_i32_0 = arith.constant 0 : i32
    %c0_i32_1 = arith.constant 0 : i32
    return %c0_i32, %c0_i32_0 : i32, i32
  }
  func.func @transform_6(%arg0: i32) -> (i32, i32, i32) {
    %c0_i32 = arith.constant 0 : i32
    %c0_i32_0 = arith.constant 0 : i32
    %c0_i32_1 = arith.constant 0 : i32
    return %arg0, %c0_i32, %c0_i32_0 : i32, i32, i32
  }
  func.func @transform_7(%arg0: i32) -> (i32, i32, i32) {
    %c0_i32 = arith.constant 0 : i32
    %c0_i32_0 = arith.constant 0 : i32
    %c0_i32_1 = arith.constant 0 : i32
    return %arg0, %c0_i32, %c0_i32_0 : i32, i32, i32
  }
}

</mosaic_0001>

<llo_original>
// kernel: tpu_custom_call.1
$region0: #{tpu_custom_call.1}
  #allocation0 [shape = 'u32[]', space=smem, size = 0x4, offset = 0x4, fixed_abs, tag = 'smem constant byte address 0x4 - core index']
  #allocation1 [shape = 'u32[72,128]{1,0:T(1,128)}', space=vmem, size = 0x9000, scoped, tag = 'internal scratch']
  %s0 = inlined_call_operand.vmem [shape: f32[4,8,4], index: 0, kind: input, shape index: {}]
  %s1 = inlined_call_operand.vmem [shape: bf16[16,16], index: 1, kind: input, shape index: {}]
  %s2 = inlined_call_operand.vmem [shape: bf16[4,32], index: 2, kind: input, shape index: {}]
  %s3 = inlined_call_operand.hbm [shape: bf16[8,32,32], index: 3, kind: input, shape index: {}]
  %s4 = inlined_call_operand.vmem [shape: bf16[1,32], index: 4, kind: input, shape index: {}]
  %s5 = inlined_call_operand.vmem [shape: f32[7,32], index: 5, kind: input, shape index: {}]
  %s6 = inlined_call_operand.hbm [shape: f32[2,2,8], index: 6, kind: output, shape index: {0}]
  %s7 = inlined_call_operand.hbm [shape: f32[4,8,32], index: 7, kind: output, shape index: {1}]
  %8 = xla_tuple %s6, %s7
  %s9 = sld [smem:[#allocation0]]
  $region69: #{tpu_custom_call.1} parent=0
    _
  %s11 = ssub.s32 1, %s9
  %s12 = scalar_select 0, %s11, %s9
  $region1: #{tpu_custom_call.1} parent=0
    #allocation2 [shape = 'u8[65536]{0}', space=vmem, size = 0x10000, scoped, tag = 'input window, operand 3, single buffered']
    #allocation3 [shape = 's32[2]{0}', space=sflag, size = 0x8, scoped, tag = 'scoped memory for tpu_custom_call.1']
    #allocation4 [shape = 's32[2]{0}', space=sflag, size = 0x8, scoped, tag = 'scoped memory for tpu_custom_call.1']
    #allocation5 [shape = 'u8[2048]{0}', space=vmem, size = 0x800, scoped, tag = 'output window, operand 0']
    #allocation6 [shape = 'u8[16384]{0}', space=vmem, size = 0x4000, scoped, tag = 'output window, operand 1']
    #allocation7 [shape = 's32[2]{0}', space=sflag, size = 0x8, scoped, tag = 'scoped memory for tpu_custom_call.1']
    %13 = vsyncpa [#allocation3], 0
    %14 = vsyncpa [#allocation4], 0
    %s15 = scalar_lea.sflag [#allocation4], 1
    %16 = vsyncpa %s15, 0
    %17 = vsyncpa [#allocation7], 0
    %s18 = scalar_lea.sflag [#allocation7], 1
    %19 = vsyncpa %s18, 0
    loop: start=0, step=1, limit=4
    $region2: #{tpu_custom_call.1} parent=1 // loop_pre_header
      _
    $region3: #{tpu_custom_call.1} parent=1 // loop_header
      %s21 = sphi 0, %s25
      %p22 = scmp.ge.s32.totalorder %s21, 4
      %s31 = sphi 0, %s33
      %s34 = sphi 0, %s31
      %s35 = sphi 0, %s34
      %s51 = sphi 0, %s35
      %s55 = sphi 0, %s55
      %s57 = sphi 0, %s55
      %s58 = sphi 0, %s57
      %s72 = sphi 0, %s58
      %s76 = sphi 0, %s76
      %s78 = sphi 0, %s76
      %s79 = sphi 0, %s78
      %s93 = sphi 0, %s79
      %s97 = sphi 0, %s97
      %s99 = sphi 0, %s97
      %s100 = sphi 0, %s99
      %s114 = sphi 0, %s100
      %s118 = sphi 0, %s118
      %s120 = sphi 0, %s118
      %s121 = sphi 0, %s120
      %s135 = sphi 0, %s121
      %s139 = sphi 0, %s139
      %s141 = sphi 0, %s139
      %s142 = sphi 0, %s141
      %s156 = sphi 0, %s142
      %s162 = sphi 0, %s164
      %s165 = sphi 0, %s162
      %s166 = sphi 0, %s165
      %s182 = sphi 0, %s166
      %s188 = sphi 0, %s190
      %s191 = sphi 0, %s188
      %s192 = sphi 0, %s191
      %s208 = sphi 0, %s192
    $region4: #{tpu_custom_call.1} parent=1 // loop_header_branch
      %24 = sbr.rel (%p22) target = $region8
    $region5: #{tpu_custom_call.1} parent=1 // loop_body
      %s26 = ssub.s32 %s21, 1
      %s27 = ssub.s32 %s21, 2
      %s28 = sadd.s32 %s21, 1
      %s29 = ssub.s32 %s21, %s28
      %p30 = scmp.eq.s32.totalorder %s29, 0
      %s32 = sadd.s32 %s31, 1
      %s33 = scalar_select %p30, %s31, %s32
      %p36 = pneg %p30
      %p37 = scmp.eq.s32.totalorder %s21, 1
      %p38 = por %p36, %p37
      %p39 = scmp.ne.s32.totalorder %s31, %s34
      %p40 = scmp.eq.s32.totalorder %s21, 0
      %p41 = por %p39, %p40
      %p42 = scmp.ne.s32.totalorder %s31, %s34
      %p43 = scmp.eq.s32.totalorder %s26, 1
      %p44 = por %p42, %p43
      %p45 = scmp.ne.s32.totalorder %s34, %s35
      %p46 = scmp.eq.s32.totalorder %s26, 0
      %p47 = por %p45, %p46
      %p48 = scmp.ne.s32.totalorder %s34, %s35
      %p49 = scmp.eq.s32.totalorder %s27, 1
      %p50 = por %p48, %p49
      %p52 = scmp.ne.s32.totalorder %s35, %s51
      %p53 = scmp.eq.s32.totalorder %s27, 0
      %p54 = por %p52, %p53
      %s56 = sadd.s32 %s55, 1
      %p59 = scmp.eq.s32.totalorder %s21, 1
      %p60 = scmp.ne.s32.totalorder %s55, %s57
      %p61 = scmp.eq.s32.totalorder %s21, 0
      %p62 = por %p60, %p61
      %p63 = scmp.ne.s32.totalorder %s55, %s57
      %p64 = scmp.eq.s32.totalorder %s26, 1
      %p65 = por %p63, %p64
      %p66 = scmp.ne.s32.totalorder %s57, %s58
      %p67 = scmp.eq.s32.totalorder %s26, 0
      %p68 = por %p66, %p67
      %p69 = scmp.ne.s32.totalorder %s57, %s58
      %p70 = scmp.eq.s32.totalorder %s27, 1
      %p71 = por %p69, %p70
      %p73 = scmp.ne.s32.totalorder %s58, %s72
      %p74 = scmp.eq.s32.totalorder %s27, 0
      %p75 = por %p73, %p74
      %s77 = sadd.s32 %s76, 1
      %p80 = scmp.eq.s32.totalorder %s21, 1
      %p81 = scmp.ne.s32.totalorder %s76, %s78
      %p82 = scmp.eq.s32.totalorder %s21, 0
      %p83 = por %p81, %p82
      %p84 = scmp.ne.s32.totalorder %s76, %s78
      %p85 = scmp.eq.s32.totalorder %s26, 1
      %p86 = por %p84, %p85
      %p87 = scmp.ne.s32.totalorder %s78, %s79
      %p88 = scmp.eq.s32.totalorder %s26, 0
      %p89 = por %p87, %p88
      %p90 = scmp.ne.s32.totalorder %s78, %s79
      %p91 = scmp.eq.s32.totalorder %s27, 1
      %p92 = por %p90, %p91
      %p94 = scmp.ne.s32.totalorder %s79, %s93
      %p95 = scmp.eq.s32.totalorder %s27, 0
      %p96 = por %p94, %p95
      %s98 = sadd.s32 %s97, 1
      %p101 = scmp.eq.s32.totalorder %s21, 1
      %p102 = scmp.ne.s32.totalorder %s97, %s99
      %p103 = scmp.eq.s32.totalorder %s21, 0
      %p104 = por %p102, %p103
      %p105 = scmp.ne.s32.totalorder %s97, %s99
      %p106 = scmp.eq.s32.totalorder %s26, 1
      %p107 = por %p105, %p106
      %p108 = scmp.ne.s32.totalorder %s99, %s100
      %p109 = scmp.eq.s32.totalorder %s26, 0
      %p110 = por %p108, %p109
      %p111 = scmp.ne.s32.totalorder %s99, %s100
      %p112 = scmp.eq.s32.totalorder %s27, 1
      %p113 = por %p111, %p112
      %p115 = scmp.ne.s32.totalorder %s100, %s114
      %p116 = scmp.eq.s32.totalorder %s27, 0
      %p117 = por %p115, %p116
      %s119 = sadd.s32 %s118, 1
      %p122 = scmp.eq.s32.totalorder %s21, 1
      %p123 = scmp.ne.s32.totalorder %s118, %s120
      %p124 = scmp.eq.s32.totalorder %s21, 0
      %p125 = por %p123, %p124
      %p126 = scmp.ne.s32.totalorder %s118, %s120
      %p127 = scmp.eq.s32.totalorder %s26, 1
      %p128 = por %p126, %p127
      %p129 = scmp.ne.s32.totalorder %s120, %s121
      %p130 = scmp.eq.s32.totalorder %s26, 0
      %p131 = por %p129, %p130
      %p132 = scmp.ne.s32.totalorder %s120, %s121
      %p133 = scmp.eq.s32.totalorder %s27, 1
      %p134 = por %p132, %p133
      %p136 = scmp.ne.s32.totalorder %s121, %s135
      %p137 = scmp.eq.s32.totalorder %s27, 0
      %p138 = por %p136, %p137
      %s140 = sadd.s32 %s139, 1
      %p143 = scmp.eq.s32.totalorder %s21, 1
      %p144 = scmp.ne.s32.totalorder %s139, %s141
      %p145 = scmp.eq.s32.totalorder %s21, 0
      %p146 = por %p144, %p145
      %p147 = scmp.ne.s32.totalorder %s139, %s141
      %p148 = scmp.eq.s32.totalorder %s26, 1
      %p149 = por %p147, %p148
      %p150 = scmp.ne.s32.totalorder %s141, %s142
      %p151 = scmp.eq.s32.totalorder %s26, 0
      %p152 = por %p150, %p151
      %p153 = scmp.ne.s32.totalorder %s141, %s142
      %p154 = scmp.eq.s32.totalorder %s27, 1
      %p155 = por %p153, %p154
      %p157 = scmp.ne.s32.totalorder %s142, %s156
      %p158 = scmp.eq.s32.totalorder %s27, 0
      %p159 = por %p157, %p158
      %s160 = ssub.s32 %s21, %s28
      %p161 = scmp.eq.s32.totalorder %s160, 0
      %s163 = sadd.s32 %s162, 1
      %s164 = scalar_select %p161, %s162, %s163
      %p167 = pneg %p161
      %p168 = scmp.eq.s32.totalorder %s21, 1
      %p169 = por %p167, %p168
      %p170 = scmp.ne.s32.totalorder %s162, %s165
      %p171 = scmp.eq.s32.totalorder %s21, 0
      %p172 = por %p170, %p171
      %p173 = scmp.ne.s32.totalorder %s162, %s165
      %p174 = scmp.eq.s32.totalorder %s26, 1
      %p175 = por %p173, %p174
      %p176 = scmp.ne.s32.totalorder %s165, %s166
      %p177 = scmp.eq.s32.totalorder %s26, 0
      %p178 = por %p176, %p177
      %p179 = scmp.ne.s32.totalorder %s165, %s166
      %p180 = scmp.eq.s32.totalorder %s27, 1
      %p181 = por %p179, %p180
      %p183 = scmp.ne.s32.totalorder %s166, %s182
      %p184 = scmp.eq.s32.totalorder %s27, 0
      %p185 = por %p183, %p184
      %s186 = ssub.s32 %s21, %s28
      %p187 = scmp.eq.s32.totalorder %s186, 0
      %s189 = sadd.s32 %s188, 1
      %s190 = scalar_select %p187, %s188, %s189
      %p193 = pneg %p187
      %p194 = scmp.eq.s32.totalorder %s21, 1
      %p195 = por %p193, %p194
      %p196 = scmp.ne.s32.totalorder %s188, %s191
      %p197 = scmp.eq.s32.totalorder %s21, 0
      %p198 = por %p196, %p197
      %p199 = scmp.ne.s32.totalorder %s188, %s191
      %p200 = scmp.eq.s32.totalorder %s26, 1
      %p201 = por %p199, %p200
      %p202 = scmp.ne.s32.totalorder %s191, %s192
      %p203 = scmp.eq.s32.totalorder %s26, 0
      %p204 = por %p202, %p203
      %p205 = scmp.ne.s32.totalorder %s191, %s192
      %p206 = scmp.eq.s32.totalorder %s27, 1
      %p207 = por %p205, %p206
      %p209 = scmp.ne.s32.totalorder %s192, %s208
      %p210 = scmp.eq.s32.totalorder %s27, 0
      %p211 = por %p209, %p210
      %p212 = scmp.le.s32.totalorder 1, %s21
      %p213 = scmp.lt.s32.totalorder %s21, 3
      %p214 = pnand %p212, %p213
      %p215 = pneg %p214
      // Predicated region
      $region9: #{tpu_custom_call.1} parent=5 // pred_check
        _
      $region10: #{tpu_custom_call.1} parent=5 // pred_check_branch
        %217 = sbr.rel (%p214) target = $region12
      $region11: #{tpu_custom_call.1} parent=5 // pred_region
        %s218 = ssub.s32 %s21, 1
        // Predicated region
        $region13: #{tpu_custom_call.1} parent=11 // pred_check
          %p219 = pneg %p68
        $region14: #{tpu_custom_call.1} parent=11 // pred_check_branch
          %221 = sbr.rel (%p219) target = $region16
        $region15: #{tpu_custom_call.1} parent=11 // pred_region
          _
        $region16: #{tpu_custom_call.1} parent=11 // pred_fallthru
          _
        // Predicated region
        $region17: #{tpu_custom_call.1} parent=11 // pred_check
          %p222 = pneg %p89
        $region18: #{tpu_custom_call.1} parent=11 // pred_check_branch
          %224 = sbr.rel (%p222) target = $region20
        $region19: #{tpu_custom_call.1} parent=11 // pred_region
          _
        $region20: #{tpu_custom_call.1} parent=11 // pred_fallthru
          _
        // Predicated region
        $region21: #{tpu_custom_call.1} parent=11 // pred_check
          %p225 = pneg %p110
        $region22: #{tpu_custom_call.1} parent=11 // pred_check_branch
          %227 = sbr.rel (%p225) target = $region24
        $region23: #{tpu_custom_call.1} parent=11 // pred_region
          %229 = vsyncadd [#allocation3], 0
          %s230 = sshll.u32 %s3, 4
          %s231 = int_to_ptr.hbm [resolvable:$true] %s230
          %s232 = sshll.u32 [#allocation2], 4
          %s233 = int_to_ptr.vmem [resolvable:$true] %s232
          %238 = dma.hbm_to_vmem [thread:$0]  %s231, 2048, %s233, [#allocation3], 64, 64, 4
        $region24: #{tpu_custom_call.1} parent=11 // pred_fallthru
          _
        // Predicated region
        $region25: #{tpu_custom_call.1} parent=11 // pred_check
          %p239 = pneg %p131
        $region26: #{tpu_custom_call.1} parent=11 // pred_check_branch
          %241 = sbr.rel (%p239) target = $region28
        $region27: #{tpu_custom_call.1} parent=11 // pred_region
          _
        $region28: #{tpu_custom_call.1} parent=11 // pred_fallthru
          _
        // Predicated region
        $region29: #{tpu_custom_call.1} parent=11 // pred_check
          %p242 = pneg %p152
        $region30: #{tpu_custom_call.1} parent=11 // pred_check_branch
          %244 = sbr.rel (%p242) target = $region32
        $region31: #{tpu_custom_call.1} parent=11 // pred_region
          _
        $region32: #{tpu_custom_call.1} parent=11 // pred_fallthru
          _
      $region12: #{tpu_custom_call.1} parent=5 // pred_fallthru
        _
      %p245 = scmp.lt.s32.totalorder %s21, 2
      // Predicated region
      $region33: #{tpu_custom_call.1} parent=5 // pred_check
        %p246 = pneg %p245
      $region34: #{tpu_custom_call.1} parent=5 // pred_check_branch
        %248 = sbr.rel (%p246) target = $region36
      $region35: #{tpu_custom_call.1} parent=5 // pred_region
        // Predicated region
        $region37: #{tpu_custom_call.1} parent=35 // pred_check
          %p249 = pneg %p41
        $region38: #{tpu_custom_call.1} parent=35 // pred_check_branch
          %251 = sbr.rel (%p249) target = $region40
        $region39: #{tpu_custom_call.1} parent=35 // pred_region
          %s252 = smul.u32 2, %s21
          %p253 = scmp.lt.s32.totalorder %s252, 3
          %s254 = scalar_select %p253, %s252, 3
          %s255 = smul.addr %s254, 8
          %s256 = scalar_lea.vmem %s0, %s255
          %s257 = smul.u32 2, %s21
        $region40: #{tpu_custom_call.1} parent=35 // pred_fallthru
          _
      $region36: #{tpu_custom_call.1} parent=5 // pred_fallthru
        _
      %p258 = scmp.le.s32.totalorder 1, %s21
      %p259 = scmp.lt.s32.totalorder %s21, 3
      %p260 = pnand %p258, %p259
      %p261 = pneg %p260
      // Predicated region
      $region41: #{tpu_custom_call.1} parent=5 // pred_check
        _
      $region42: #{tpu_custom_call.1} parent=5 // pred_check_branch
        %263 = sbr.rel (%p260) target = $region44
      $region43: #{tpu_custom_call.1} parent=5 // pred_region
        %s264 = ssub.s32 %s21, 1
        // Predicated region
        $region45: #{tpu_custom_call.1} parent=43 // pred_check
          %p265 = pneg %p110
        $region46: #{tpu_custom_call.1} parent=43 // pred_check_branch
          %267 = sbr.rel (%p265) target = $region48
        $region47: #{tpu_custom_call.1} parent=43 // pred_region
          %269 = dma.done [#allocation3], 2048
        $region48: #{tpu_custom_call.1} parent=43 // pred_fallthru
          _
        %s270 = smul.u32 2, %s26
        %p271 = scmp.lt.s32.totalorder %s270, 3
        %s272 = scalar_select %p271, %s270, 3
        %s273 = smul.addr %s272, 8
        %s274 = scalar_lea.vmem %s0, %s273
        %p275 = pneg %p47
        %p276 = pneg %p44
        %p277 = pneg %p68
        %p278 = pneg %p65
        %p279 = pneg %p89
        %p280 = pneg %p86
        %p281 = pneg %p110
        %p282 = pneg %p107
        %p283 = pneg %p131
        %p284 = pneg %p128
        %p285 = pneg %p152
        %p286 = pneg %p149
        %p287 = pneg %p178
        %p288 = pneg %p175
        %s289 = sand.u32 %s165, 1
        %s290 = scalar_lea.sflag [#allocation4], %s289
        %s291 = sand.u32 %s165, 1
        %s292 = smul.addr %s291, 2
        %s293 = scalar_lea.vmem [#allocation5], %s292
        %p294 = pneg %p204
        %p295 = pneg %p201
        %s296 = sand.u32 %s191, 1
        %s297 = scalar_lea.sflag [#allocation7], %s296
        %s298 = sand.u32 %s191, 1
        %s299 = smul.addr %s298, 16
        %s300 = scalar_lea.vmem [#allocation6], %s299
        %s301 = smul.u32 2, %s26
        %p302 = scmp.lt.s32.totalorder %s301, 3
        %s303 = scalar_select %p302, %s301, 3
        %s304 = smul.addr %s303, 8
        %s305 = scalar_lea.vmem %s0, %s304
        %s306 = smul.u32 2, %s26
        %s307 = smul.u32 2, %s26
        %v309 = vld [vmem:[%s305] sm:$0xff]
        %v310 = vld [vmem:[%s305 + $0x8] sm:$0xff]
        %v311 = vld [vmem:[%s1] sm:$0xf]
        %v312 = vld [vmem:[%s1 + $0x4] sm:$0xf]
        %v313 = vld [vmem:[%s5] sm:$0x7f]
        %v314 = vld [vmem:[%s2] sm:$0x3]
        %v315 = vpack.c.bf16 %v310, %v309
        %v316 = vperm.slane %v313, 0
        %vm317 = vcmask 31744
        %v319 = vsel %vm317, %v315, 0
        %vm321 = vcmask 1041408
        %v323 = vsel %vm321, %v314, 0
        %325 = vmatpush.bf16.msra.mxu0 0
        %326 = vmatpush.bf16.msra.mxu0 0
        %327 = vmatpush.bf16.msra.mxu0 0
        %328 = vmatpush.bf16.msra.mxu0 0
        %329 = vmatpush.bf16.msra.mxu0 0
        %330 = vmatpush.bf16.msra.mxu0 0
        %331 = vmatpush.bf16.msra.mxu0 0
        %332 = vmatpush.bf16.msra.mxu0 %v323
        %333 = vmatmul.bf16.gmra.mxu0 %v319
        %v334 = vpop.f32.mrf.mxu0
        %v335 = vadd.f32 %v316, %v334
        %v336 = vpop.f32.mrf.mxu0
        %v337 = vadd.f32 %v316, %v336
        %338 = vdwg.mxu0
        %v339 = vld [vmem:[#allocation2] sm:$0xf]
        %v340 = vld [vmem:[#allocation2 + $0x4] sm:$0xf]
        %v341 = vld [vmem:[#allocation2 + $0x8] sm:$0xf]
        %v342 = vld [vmem:[#allocation2 + $0xc] sm:$0xf]
        %v343 = vpack.c.bf16 %v337, %v335
        %v348 = vunpack.c.l.b16 %v339
        %v349 = vunpack.c.l.b16 %v340
        %v350 = vunpack.c.l.b16 %v341
        %v351 = vunpack.c.l.b16 %v342
        %v352 = vpack.c.b16 %v349, %v348
        %v353 = vpack.c.b16 %v351, %v350
        %vm356 = vcmask 261120
        %v358 = vsel %vm356, %v343, 0
        %360 = vmatpush.bf16.msra.mxu0 0
        %361 = vmatpush.bf16.msra.mxu0 0
        %362 = vmatpush.bf16.msra.mxu0 0
        %363 = vmatpush.bf16.msra.mxu0 0
        %364 = vmatpush.bf16.msra.mxu0 0
        %365 = vmatpush.bf16.msra.mxu0 0
        %366 = vmatpush.bf16.msra.mxu0 %v353
        %367 = vmatpush.bf16.msra.mxu0 %v352
        %368 = vmatmul.bf16.gmra.mxu0 %v358
        %v369 = vpop.f32.mrf.mxu0
        %v370 = vadd.f32 0.0, %v369
        %v371 = vpop.f32.mrf.mxu0
        %v372 = vadd.f32 0.0, %v371
        %373 = vdwg.mxu0
        %v374 = vpack.c.bf16 %v372, %v370
        %v375 = vperm.slane %v313, 1
        %v378 = vunpack.c.l.b16 %v311
        %v379 = vunpack.c.l.b16 %v312
        %v380 = vpack.c.b16 %v379, %v378
        %vm381 = vcmask 130048
        %v383 = vsel %vm381, %v380, 0
        %385 = vmatpush.bf16.msra.mxu0 0
        %386 = vmatpush.bf16.msra.mxu0 0
        %387 = vmatpush.bf16.msra.mxu0 0
        %388 = vmatpush.bf16.msra.mxu0 0
        %389 = vmatpush.bf16.msra.mxu0 0
        %390 = vmatpush.bf16.msra.mxu0 0
        %391 = vmatpush.bf16.msra.mxu0 0
        %392 = vmatpush.bf16.msra.mxu0 %v374
        %393 = vmatmul.bf16.gmra.mxu0 %v383
        %v394 = vpop.f32.mrf.mxu0
        %v395 = vadd.f32 %v375, %v394
        %v396 = vpop.f32.mrf.mxu0
        %v397 = vadd.f32 %v375, %v396
        %398 = vdwg.mxu0
        %v399 = vmax.f32 %v395, 0.0
        %v400 = vmax.f32 %v397, 0.0
        %s401 = scalar_lea.vmem [#allocation2], 16
        %v402 = vld [vmem:[%s401] sm:$0xf]
        %v403 = vld [vmem:[%s401 + $0x4] sm:$0xf]
        %v404 = vld [vmem:[%s401 + $0x8] sm:$0xf]
        %v405 = vld [vmem:[%s401 + $0xc] sm:$0xf]
        %v406 = vpack.c.bf16 %v400, %v399
        %v411 = vunpack.c.l.b16 %v402
        %v412 = vunpack.c.l.b16 %v403
        %v413 = vunpack.c.l.b16 %v404
        %v414 = vunpack.c.l.b16 %v405
        %v415 = vpack.c.b16 %v412, %v411
        %v416 = vpack.c.b16 %v414, %v413
        %v420 = vsel %vm356, %v406, 0
        %422 = vmatpush.bf16.msra.mxu0 0
        %423 = vmatpush.bf16.msra.mxu0 0
        %424 = vmatpush.bf16.msra.mxu0 0
        %425 = vmatpush.bf16.msra.mxu0 0
        %426 = vmatpush.bf16.msra.mxu0 0
        %427 = vmatpush.bf16.msra.mxu0 0
        %428 = vmatpush.bf16.msra.mxu0 %v416
        %429 = vmatpush.bf16.msra.mxu0 %v415
        %430 = vmatmul.bf16.gmra.mxu0 %v420
        %v431 = vpop.f32.mrf.mxu0
        %v432 = vadd.f32 0.0, %v431
        %v433 = vpop.f32.mrf.mxu0
        %v434 = vadd.f32 0.0, %v433
        %435 = vdwg.mxu0
        %v436 = vpack.c.bf16 %v434, %v432
        %v437 = vperm.slane %v313, 2
        %438 = vmatpush.bf16.msra.mxu0 0
        %439 = vmatpush.bf16.msra.mxu0 0
        %440 = vmatpush.bf16.msra.mxu0 0
        %441 = vmatpush.bf16.msra.mxu0 0
        %442 = vmatpush.bf16.msra.mxu0 0
        %443 = vmatpush.bf16.msra.mxu0 0
        %444 = vmatpush.bf16.msra.mxu0 0
        %445 = vmatpush.bf16.msra.mxu0 %v436
        %446 = vmatmul.bf16.gmra.mxu0 %v383
        %v447 = vpop.f32.mrf.mxu0
        %v448 = vadd.f32 %v437, %v447
        %v449 = vpop.f32.mrf.mxu0
        %v450 = vadd.f32 %v437, %v449
        %451 = vdwg.mxu0
        %v452 = vmax.f32 %v448, 0.0
        %v453 = vmax.f32 %v450, 0.0
        %s454 = scalar_lea.vmem [#allocation2], 32
        %v455 = vld [vmem:[%s454] sm:$0xf]
        %v456 = vld [vmem:[%s454 + $0x4] sm:$0xf]
        %v457 = vld [vmem:[%s454 + $0x8] sm:$0xf]
        %v458 = vld [vmem:[%s454 + $0xc] sm:$0xf]
        %s459 = scalar_lea.vmem [#allocation2], 48
        %v460 = vld [vmem:[%s459] sm:$0xf]
        %v461 = vld [vmem:[%s459 + $0x4] sm:$0xf]
        %v462 = vld [vmem:[%s459 + $0x8] sm:$0xf]
        %v463 = vld [vmem:[%s459 + $0xc] sm:$0xf]
        %v468 = vunpack.c.l.b16 %v460
        %v469 = vunpack.c.l.b16 %v461
        %v470 = vunpack.c.l.b16 %v462
        %v471 = vunpack.c.l.b16 %v463
        %v472 = vpack.c.b16 %v469, %v468
        %v473 = vpack.c.b16 %v471, %v470
        %476 = vmatpush.bf16.msra.mxu0 0
        %477 = vmatpush.bf16.msra.mxu0 0
        %478 = vmatpush.bf16.msra.mxu0 0
        %479 = vmatpush.bf16.msra.mxu0 0
        %480 = vmatpush.bf16.msra.mxu0 0
        %481 = vmatpush.bf16.msra.mxu0 0
        %482 = vmatpush.bf16.msra.mxu0 %v473
        %483 = vmatpush.bf16.msra.mxu0 %v472
        %484 = vmatmul.bf16.gmra.mxu0 %v420
        %v485 = vpop.f32.mrf.mxu0
        %v486 = vadd.f32 0.0, %v485
        %v487 = vpop.f32.mrf.mxu0
        %v488 = vadd.f32 0.0, %v487
        %489 = vdwg.mxu0
        %v494 = vunpack.c.l.b16 %v455
        %v495 = vunpack.c.l.b16 %v456
        %v496 = vunpack.c.l.b16 %v457
        %v497 = vunpack.c.l.b16 %v458
        %v498 = vpack.c.b16 %v495, %v494
        %v499 = vpack.c.b16 %v497, %v496
        %502 = vmatpush.bf16.msra.mxu0 0
        %503 = vmatpush.bf16.msra.mxu0 0
        %504 = vmatpush.bf16.msra.mxu0 0
        %505 = vmatpush.bf16.msra.mxu0 0
        %506 = vmatpush.bf16.msra.mxu0 0
        %507 = vmatpush.bf16.msra.mxu0 0
        %508 = vmatpush.bf16.msra.mxu0 %v499
        %509 = vmatpush.bf16.msra.mxu0 %v498
        %510 = vmatmul.bf16.gmra.mxu0 %v358
        %v511 = vpop.f32.mrf.mxu0
        %v512 = vadd.f32 %v486, %v511
        %v513 = vpop.f32.mrf.mxu0
        %v514 = vadd.f32 %v488, %v513
        %515 = vdwg.mxu0
        %s516 = scalar_lea.vmem [#allocation2], 64
        %v517 = vld [vmem:[%s516] sm:$0xf]
        %v518 = vld [vmem:[%s516 + $0x4] sm:$0xf]
        %v519 = vld [vmem:[%s516 + $0x8] sm:$0xf]
        %v520 = vld [vmem:[%s516 + $0xc] sm:$0xf]
        %v521 = vpack.c.bf16 %v453, %v452
        %v526 = vunpack.c.l.b16 %v517
        %v527 = vunpack.c.l.b16 %v518
        %v528 = vunpack.c.l.b16 %v519
        %v529 = vunpack.c.l.b16 %v520
        %v530 = vpack.c.b16 %v527, %v526
        %v531 = vpack.c.b16 %v529, %v528
        %v535 = vsel %vm356, %v521, 0
        %537 = vmatpush.bf16.msra.mxu0 0
        %538 = vmatpush.bf16.msra.mxu0 0
        %539 = vmatpush.bf16.msra.mxu0 0
        %540 = vmatpush.bf16.msra.mxu0 0
        %541 = vmatpush.bf16.msra.mxu0 0
        %542 = vmatpush.bf16.msra.mxu0 0
        %543 = vmatpush.bf16.msra.mxu0 %v531
        %544 = vmatpush.bf16.msra.mxu0 %v530
        %545 = vmatmul.bf16.gmra.mxu0 %v535
        %v546 = vpop.f32.mrf.mxu0
        %v547 = vadd.f32 0.0, %v546
        %v548 = vpop.f32.mrf.mxu0
        %v549 = vadd.f32 0.0, %v548
        %550 = vdwg.mxu0
        %v551 = vadd.f32 %v512, %v547
        %v552 = vadd.f32 %v514, %v549
        %v553 = vperm.slane %v313, 3
        %v554 = vadd.f32 %v551, %v553
        %v555 = vadd.f32 %v552, %v553
        %556 = vst.msk [vmem:[%s300] sm:$0xff] %vm356, %v554
        %557 = vst.msk [vmem:[%s300 + $0x8] sm:$0xff] %vm356, %v555
        %559 = vset.pattern.permute.xlu0 3
        %560 = vperm.xlu0 %559, %v309
        %v561 = vpop.permute.xlu0 %560
        %564 = vset.pattern.permute.xlu0 3
        %565 = vperm.xlu0 %564, %v310
        %v566 = vpop.permute.xlu0 %565
        %v568 = vmul.f32 %v561, %v554
        %v569 = vmul.f32 %v566, %v555
        %v570 = vsel %vm356, %v568, 0.0
        %v571 = vrot.slane %v570, 4
        %v572 = vadd.f32 %v570, %v571
        %v573 = vrot.slane %v572, 2
        %v574 = vadd.f32 %v572, %v573
        %v575 = vrot.slane %v574, 1
        %v576 = vadd.f32 %v574, %v575
        %v577 = vsel %vm356, %v569, 0.0
        %v578 = vrot.slane %v577, 4
        %v579 = vadd.f32 %v577, %v578
        %v580 = vrot.slane %v579, 2
        %v581 = vadd.f32 %v579, %v580
        %v582 = vrot.slane %v581, 1
        %v583 = vadd.f32 %v581, %v582
        %s584 = scalar_lea.vmem [#allocation2], 80
        %v585 = vld [vmem:[%s584] sm:$0xf]
        %v586 = vld [vmem:[%s584 + $0x4] sm:$0xf]
        %v587 = vld [vmem:[%s584 + $0x8] sm:$0xf]
        %v588 = vld [vmem:[%s584 + $0xc] sm:$0xf]
        %v589 = vpack.c.bf16 %v576, %v576
        %v590 = vpack.c.bf16 %v583, %v583
        %v591 = vperm.slane %v313, 4
        %v594 = vunpack.c.l.b16 %v589
        %v595 = vunpack.c.l.b16 %v590
        %vm596 = vcmask 1041409
        %v597 = vsel %vm596, %v595, %v594
        %v598 = vpack.c.b16 %v597, %v597
        %v603 = vunpack.c.l.b16 %v585
        %v604 = vunpack.c.l.b16 %v586
        %v605 = vunpack.c.l.b16 %v587
        %v606 = vunpack.c.l.b16 %v588
        %v607 = vpack.c.b16 %v604, %v603
        %v608 = vpack.c.b16 %v606, %v605
        %v612 = vsel %vm356, %v598, 0
        %614 = vmatpush.bf16.msra.mxu0 0
        %615 = vmatpush.bf16.msra.mxu0 0
        %616 = vmatpush.bf16.msra.mxu0 0
        %617 = vmatpush.bf16.msra.mxu0 0
        %618 = vmatpush.bf16.msra.mxu0 0
        %619 = vmatpush.bf16.msra.mxu0 0
        %620 = vmatpush.bf16.msra.mxu0 %v608
        %621 = vmatpush.bf16.msra.mxu0 %v607
        %622 = vmatmul.bf16.gmra.mxu0 %v612
        %v623 = vpop.f32.mrf.mxu0
        %v624 = vadd.f32 %v591, %v623
        %v625 = vpop.f32.mrf.mxu0
        %626 = vdwg.mxu0
        %v627 = vmax.f32 %v624, 0.0
        %s628 = scalar_lea.vmem [#allocation2], 96
        %v629 = vld [vmem:[%s628] sm:$0xf]
        %v630 = vld [vmem:[%s628 + $0x4] sm:$0xf]
        %v631 = vld [vmem:[%s628 + $0x8] sm:$0xf]
        %v632 = vld [vmem:[%s628 + $0xc] sm:$0xf]
        %v633 = vpack.c.bf16 %v627, %v627
        %v638 = vunpack.c.l.b16 %v629
        %v639 = vunpack.c.l.b16 %v630
        %v640 = vunpack.c.l.b16 %v631
        %v641 = vunpack.c.l.b16 %v632
        %v642 = vpack.c.b16 %v639, %v638
        %v643 = vpack.c.b16 %v641, %v640
        %v647 = vsel %vm356, %v633, 0
        %649 = vmatpush.bf16.msra.mxu0 0
        %650 = vmatpush.bf16.msra.mxu0 0
        %651 = vmatpush.bf16.msra.mxu0 0
        %652 = vmatpush.bf16.msra.mxu0 0
        %653 = vmatpush.bf16.msra.mxu0 0
        %654 = vmatpush.bf16.msra.mxu0 0
        %655 = vmatpush.bf16.msra.mxu0 %v643
        %656 = vmatpush.bf16.msra.mxu0 %v642
        %657 = vmatmul.bf16.gmra.mxu0 %v647
        %v658 = vpop.f32.mrf.mxu0
        %v659 = vadd.f32 0.0, %v658
        %v660 = vpop.f32.mrf.mxu0
        %661 = vdwg.mxu0
        %v662 = vmax.f32 %v554, 0.0
        %v663 = vmax.f32 %v555, 0.0
        %s664 = scalar_lea.vmem [#allocation2], 112
        %v665 = vld [vmem:[%s664] sm:$0xf]
        %v666 = vld [vmem:[%s664 + $0x4] sm:$0xf]
        %v667 = vld [vmem:[%s664 + $0x8] sm:$0xf]
        %v668 = vld [vmem:[%s664 + $0xc] sm:$0xf]
        %v669 = vpack.c.bf16 %v663, %v662
        %v674 = vunpack.c.l.b16 %v665
        %v675 = vunpack.c.l.b16 %v666
        %v676 = vunpack.c.l.b16 %v667
        %v677 = vunpack.c.l.b16 %v668
        %v678 = vpack.c.b16 %v675, %v674
        %v679 = vpack.c.b16 %v677, %v676
        %v683 = vsel %vm356, %v669, 0
        %685 = vmatpush.bf16.msra.mxu0 0
        %686 = vmatpush.bf16.msra.mxu0 0
        %687 = vmatpush.bf16.msra.mxu0 0
        %688 = vmatpush.bf16.msra.mxu0 0
        %689 = vmatpush.bf16.msra.mxu0 0
        %690 = vmatpush.bf16.msra.mxu0 0
        %691 = vmatpush.bf16.msra.mxu0 %v679
        %692 = vmatpush.bf16.msra.mxu0 %v678
        %693 = vmatmul.bf16.gmra.mxu0 %v683
        %v694 = vpop.f32.mrf.mxu0
        %v695 = vadd.f32 0.0, %v694
        %v696 = vpop.f32.mrf.mxu0
        %v697 = vadd.f32 0.0, %v696
        %698 = vdwg.mxu0
        %v700 = vrot.slane %v659, 1
        %v701 = vperm.slane %v659, 0
        %v702 = vperm.slane %v700, 0
        %v705 = vadd.f32 %v695, %v701
        %v706 = vadd.f32 %v697, %v702
        %v707 = vperm.slane %v313, 5
        %v708 = vadd.f32 %v705, %v707
        %v709 = vadd.f32 %v706, %v707
        %v710 = vmax.f32 %v708, 0.0
        %v711 = vmax.f32 %v709, 0.0
        %v712 = vld [vmem:[%s4] sm:$0x1]
        %v713 = vunpack.c.l.bf16 %v712
        %v714 = vperm.slane %v713, 0
        %v715 = vmul.f32 %v710, %v714
        %v716 = vmul.f32 %v711, %v714
        %v717 = vsel %vm356, %v715, 0.0
        %718 = vadd.xlane.f32.xlu0 %v717
        %v719 = vpop.xlane.xlu0 %718
        %v720 = vsel %vm356, %v716, 0.0
        %721 = vadd.xlane.f32.xlu0 %v720
        %v722 = vpop.xlane.xlu0 %721
        %v724 = vrot.slane %v313, 6
        %s725 = vtos %v724
        %v726 = vstv %s725
        %v728 = vadd.f32 %v719, %v726
        %v729 = vadd.f32 %v722, %v726
        %v732 = vlaneseq
        %v733 = vand.u32 %v732, 127
        %v734 = vperm.slane %v728, %v733
        %v735 = vperm.slane %v729, %v733
        %v736 = vsel %vm596, %v735, %v734
        %vm738 = vcmask 58368
        %739 = vst.msk [vmem:[%s293] sm:$0x3] %vm738, %v736
        %s740 = sand.u32 %s165, 1
        %s741 = scalar_lea.sflag [#allocation4], %s740
        %s742 = sand.u32 %s165, 1
        %s743 = smul.addr %s742, 2
        %s744 = scalar_lea.vmem [#allocation5], %s743
        %s745 = sand.u32 %s191, 1
        %s746 = scalar_lea.sflag [#allocation7], %s745
        %s747 = sand.u32 %s191, 1
        %s748 = smul.addr %s747, 16
        %s749 = scalar_lea.vmem [#allocation6], %s748
        // Predicated region
        $region49: #{tpu_custom_call.1} parent=43 // pred_check
          %p750 = pneg %p175
        $region50: #{tpu_custom_call.1} parent=43 // pred_check_branch
          %752 = sbr.rel (%p750) target = $region52
        $region51: #{tpu_custom_call.1} parent=43 // pred_region
          %754 = vsyncadd %s741, 0
          %s755 = smul.addr %s26, 2
          %s756 = scalar_lea.hbm %s6, %s755
          %s758 = sshll.u32 %s744, 4
          %s759 = int_to_ptr.vmem [resolvable:$true] %s758
          %s760 = sshll.u32 %s756, 4
          %s761 = int_to_ptr.hbm [resolvable:$true] %s760
          %763 = dma.vmem_to_hbm [thread:$0]  %s759, 32, %s761, %s741
        $region52: #{tpu_custom_call.1} parent=43 // pred_fallthru
          _
        // Predicated region
        $region53: #{tpu_custom_call.1} parent=43 // pred_check
          %p764 = pneg %p201
        $region54: #{tpu_custom_call.1} parent=43 // pred_check_branch
          %766 = sbr.rel (%p764) target = $region56
        $region55: #{tpu_custom_call.1} parent=43 // pred_region
          %s767 = smul.u32 2, %s26
          %769 = vsyncadd %s746, 0
          %s770 = smul.addr %s767, 8
          %s771 = scalar_lea.hbm %s7, %s770
          %s772 = sshll.u32 %s749, 4
          %s773 = int_to_ptr.vmem [resolvable:$true] %s772
          %s774 = sshll.u32 %s771, 4
          %s775 = int_to_ptr.hbm [resolvable:$true] %s774
          %780 = dma.vmem_to_hbm [thread:$0]  %s773, 256, %s775, %s746, 128, 128, 8
        $region56: #{tpu_custom_call.1} parent=43 // pred_fallthru
          _
      $region44: #{tpu_custom_call.1} parent=5 // pred_fallthru
        _
      %p781 = scmp.le.s32.totalorder 2, %s21
      // Predicated region
      $region57: #{tpu_custom_call.1} parent=5 // pred_check
        %p782 = pneg %p781
      $region58: #{tpu_custom_call.1} parent=5 // pred_check_branch
        %784 = sbr.rel (%p782) target = $region60
      $region59: #{tpu_custom_call.1} parent=5 // pred_region
        %s785 = ssub.s32 %s21, 2
        // Predicated region
        $region61: #{tpu_custom_call.1} parent=59 // pred_check
          %p786 = pneg %p181
        $region62: #{tpu_custom_call.1} parent=59 // pred_check_branch
          %788 = sbr.rel (%p786) target = $region64
        $region63: #{tpu_custom_call.1} parent=59 // pred_region
          %s789 = sand.u32 %s166, 1
          %s790 = scalar_lea.sflag [#allocation4], %s789
          %s791 = sand.u32 %s166, 1
          %s792 = smul.addr %s791, 2
          %s793 = scalar_lea.vmem [#allocation5], %s792
          %795 = dma.done %s790, 32
        $region64: #{tpu_custom_call.1} parent=59 // pred_fallthru
          _
        // Predicated region
        $region65: #{tpu_custom_call.1} parent=59 // pred_check
          %p796 = pneg %p207
        $region66: #{tpu_custom_call.1} parent=59 // pred_check_branch
          %798 = sbr.rel (%p796) target = $region68
        $region67: #{tpu_custom_call.1} parent=59 // pred_region
          %s799 = sand.u32 %s192, 1
          %s800 = scalar_lea.sflag [#allocation7], %s799
          %s801 = sand.u32 %s192, 1
          %s802 = smul.addr %s801, 16
          %s803 = scalar_lea.vmem [#allocation6], %s802
          %805 = dma.done %s800, 256
        $region68: #{tpu_custom_call.1} parent=59 // pred_fallthru
          _
      $region60: #{tpu_custom_call.1} parent=5 // pred_fallthru
        _
    $region6: #{tpu_custom_call.1} parent=1 // loop_footer
      %s25 = sadd.s32 1, %s21
    $region7: #{tpu_custom_call.1} parent=1 // loop_footer_branch
      %20 = sbr.rel target = $region3
    $region8: #{tpu_custom_call.1} parent=1 // loop_exit
      _
    %806 = vsyncpa [#allocation3], 1
    %s807 = scalar_lea.sflag [#allocation3], 1
    %808 = vsyncpa %s807, 1
    %809 = vsyncpa [#allocation4], 1
    %s810 = scalar_lea.sflag [#allocation4], 1
    %811 = vsyncpa %s810, 1
    %812 = vsyncpa [#allocation7], 1
    %s813 = scalar_lea.sflag [#allocation7], 1
    %814 = vsyncpa %s813, 1

</llo_original>
